<compile_context>
chip_gen: v6e
topology: v6e:2x2x1
jax: 0.10.0
libtpu: 0.0.40
codegen_flags: <defaults>
</compile_context>

<pallas_src>
import jax
import jax.numpy as jnp
from jax import lax
from jax.experimental import pallas as pl
from jax.experimental.pallas import tpu as pltpu


def _round_up(a, b):
    return ((a + b - 1) // b) * b


def _pick_tm(n, tm_req):
    """Row tile: large, multiple of 8, preferring >=4 grid steps and an even step count
    (megacore load balance + gives the pipeliner a step to prefetch behind the MXU)."""
    hi = max(8, min(_round_up(int(tm_req), 8), _round_up(int(n), 8)))
    best, best_key = 8, None
    for t in range(8, hi + 1, 8):
        steps = -(-n // t)
        key = (steps >= 4, steps >= 2, steps % 2 == 0 or steps == 1, t)
        if best_key is None or key > best_key:
            best, best_key = t, key
    return best


# ---------------------------------------------------------------------------
# Kernels
# ---------------------------------------------------------------------------
def _epilogue(h_pre, b1_ref, gw2_ref, c2_ref, o_ref):
    """ReLU + two-pass LayerNorm + folded (gamma/beta/w2/b2) output head, all in f32."""
    h = jnp.maximum(h_pre + b1_ref[...], 0.0)                    # bias + ReLU (VPU)

    inv_h = jnp.float32(1.0 / h.shape[-1])
    # Two-pass moments: no E[h^2]-E[h]^2 cancellation (review correctness concern).
    mean = jnp.sum(h, axis=-1, keepdims=True) * inv_h            # sweep 1 (XLU reduce)
    d = h - mean
    # Sweep 2: both reductions consume the same centered d vregs back-to-back.
    var = jnp.sum(d * d, axis=-1, keepdims=True) * inv_h
    dot_gw2 = jnp.sum(d * gw2_ref[...], axis=-1, keepdims=True)
    scale = lax.rsqrt(var + jnp.float32(1e-12))                  # EUP (free slot)

    # Folded:  sum(((h-mean)*scale*gamma + beta) * w2) + b2
    #        = scale * sum((h-mean) * (gamma*w2)) + (sum(beta*w2) + b2)
    o_ref[...] = (dot_gw2 * scale + c2_ref[...]).astype(o_ref.dtype)


def itm_kernel_single(x_ref, w1_ref, b1_ref, gw2_ref, c2_ref, o_ref):
    """Fast path: whole W1 resident in VMEM, one MXU matmul per row tile, no scratch."""
    h_pre = jnp.dot(x_ref[...], w1_ref[...], preferred_element_type=jnp.float32)
    _epilogue(h_pre, b1_ref, gw2_ref, c2_ref, o_ref)


def itm_kernel_ktiled(x_ref, w1_ref, b1_ref, gw2_ref, c2_ref, o_ref, acc_ref):
    """K-tiled path: accumulate x_tile @ w1_tile into f32 VMEM scratch; epilogue at last k."""
    k = pl.program_id(1)

    @pl.when(k == 0)
    def _():
        acc_ref[...] = jnp.zeros_like(acc_ref)

    acc_ref[...] += jnp.dot(x_ref[...], w1_ref[...], preferred_element_type=jnp.float32)

    @pl.when(k == pl.num_programs(1) - 1)
    def _():
        _epilogue(acc_ref[...], b1_ref, gw2_ref, c2_ref, o_ref)


# ---------------------------------------------------------------------------
# Wrapper
# ---------------------------------------------------------------------------
def itm_prediction(x, w1, b1, gamma, beta, w2, b2, *, tm=512, tk=None,
                   compute_dtype=jnp.bfloat16):
    """x: (B, S, H) -> (B, S, 1). Entire forward runs in a single fused Pallas kernel.

    compute_dtype: dtype of the MXU inputs x / w1 (default bf16); accumulation, LayerNorm
    and the output head stay in f32. Output keeps x's original dtype.
    tk: optional contraction tile (must divide H and be a multiple of 128, or equal H).
    """
    B, S, H = x.shape
    N = B * S
    out_dtype = x.dtype

    if compute_dtype is not None:
        x = x.astype(compute_dtype)
        w1 = w1.astype(compute_dtype)
    xf = x.reshape(N, H)

    # ---- Fold the LayerNorm affine + second Linear into two small f32 constants ----
    gamma32 = gamma.reshape(-1).astype(jnp.float32)
    beta32 = beta.reshape(-1).astype(jnp.float32)
    w2_32 = w2.reshape(-1).astype(jnp.float32)
    gw2 = (gamma32 * w2_32).reshape(1, H)
    c2 = (jnp.sum(beta32 * w2_32) + b2.reshape(()).astype(jnp.float32)).reshape(1, 1)
    b1_2d = b1.reshape(1, H).astype(jnp.float32)

    x_item = jnp.dtype(xf.dtype).itemsize
    w_item = jnp.dtype(w1.dtype).itemsize
    o_item = jnp.dtype(out_dtype).itemsize

    # ---- generation-aware VMEM capacity (v5e/v6e: 128 MiB, v7x: 64 MiB) ----
    try:
        vmem_cap = int(pltpu.get_tpu_info().vmem_capacity_bytes)
    except Exception:
        vmem_cap = 64 << 20  # conservative (v7x) fallback

    # ---- contraction tile tk: keep W1 resident when it fits, else stream (tk, H) slabs ----
    if tk is not None:
        tk = int(tk)
        if H % tk != 0 or (tk != H and tk % 128 != 0):
            raise ValueError("tk must divide H and be a multiple of 128 (or equal H)")
    else:
        tk = H
        w1_budget = int(0.35 * vmem_cap)
        if H % 128 == 0 and H * H * w_item > w1_budget:
            for cand in (2048, 1024, 512, 256, 128):
                if H % cand == 0 and 2 * cand * H * w_item <= w1_budget:
                    tk = cand
                    break
            else:
                tk = 128  # stream in the smallest legal slabs
        # (if H is not a multiple of 128 we keep W1 whole; correctness over footprint)
    num_k = H // tk

    # ---- row tile tm: big, multiple of 8, >=4 / even grid steps when N allows ----
    tm = _pick_tm(N, tm)

    def _vmem_need(tm_):
        f32_work = (4 if num_k > 1 else 3) * tm_ * H * 4   # acc (+) h, d live f32 tiles
        return (2 * tm_ * tk * x_item                      # x tile, double buffered
                + (1 if num_k == 1 else 2) * tk * H * w_item
                + 2 * tm_ * o_item
                + 4 * H * 4                                # b1, gw2, c2 (+ slack)
                + f32_work)

    while _vmem_need(tm) > 0.8 * vmem_cap and tm > 8:
        tm = max(8, _round_up(tm // 2, 8))

    grid = (pl.cdiv(N, tm), num_k)
    vmem_limit = int(min(max(_vmem_need(tm) * 1.25, 4 << 20), int(0.9 * vmem_cap)))

    cost = pl.CostEstimate(
        flops=int(2 * N * H * H + 8 * N * H),
        transcendentals=int(N),                            # one rsqrt per row
        bytes_accessed=int(N * H * x_item + H * H * w_item + N * o_item + 4 * H * 4),
    )

    def _build_and_run(single_buffer_invariants):
        def invariant(shape):
            # Grid-invariant params never get re-fetched: a single buffer is enough.
            if single_buffer_invariants:
                return pl.BlockSpec(shape, lambda i, k: (0, 0),
                                    pipeline_mode=pl.Buffered(1))
            return pl.BlockSpec(shape, lambda i, k: (0, 0))

        if num_k == 1:
            kernel = itm_kernel_single
            scratch_shapes = []
            w1_spec = invariant((tk, H))                          # resident, single buffer
        else:
            kernel = itm_kernel_ktiled
            scratch_shapes = [pltpu.VMEM((tm, H), jnp.float32)]   # f32 accumulator
            w1_spec = pl.BlockSpec((tk, H), lambda i, k: (k, 0))  # streamed, double buffer

        return pl.pallas_call(
            kernel,
            out_shape=jax.ShapeDtypeStruct((N, 1), out_dtype),
            grid_spec=pltpu.PrefetchScalarGridSpec(
                num_scalar_prefetch=0,
                grid=grid,
                in_specs=[
                    pl.BlockSpec((tm, tk), lambda i, k: (i, k)),  # x row/K tile
                    w1_spec,                                      # W1
                    invariant((1, H)),                            # b1
                    invariant((1, H)),                            # gw2 = gamma*w2
                    invariant((1, 1)),                            # c2 = sum(beta*w2)+b2
                ],
                out_specs=pl.BlockSpec((tm, 1), lambda i, k: (i, 0)),
                scratch_shapes=scratch_shapes,
            ),
            compiler_params=pltpu.CompilerParams(
                dimension_semantics=("parallel", "arbitrary"),
                vmem_limit_bytes=vmem_limit,
            ),
            cost_estimate=cost,
        )(xf, w1, b1_2d, gw2, c2)

    try:
        out = _build_and_run(True)
    except Exception:
        # pipeline_mode=pl.Buffered(1) unsupported on this jax/libtpu -> default buffering.
        out = _build_and_run(False)

    return out.reshape(B, S, 1)


def itm_prediction_ref(x, w1, b1, gamma, beta, w2, b2):
    """Pure-JAX reference of the PyTorch forward (two-pass LayerNorm, eps=1e-12)."""
    h = jnp.maximum(x @ w1 + b1, 0.0)
    mean = jnp.mean(h, axis=-1, keepdims=True)
    var = jnp.mean((h - mean) ** 2, axis=-1, keepdims=True)
    hn = (h - mean) / jnp.sqrt(var + 1e-12) * gamma + beta
    return hn @ w2.reshape(-1, 1) + b2


if __name__ == "__main__":
    key = jax.random.PRNGKey(0)
    keys = jax.random.split(key, 12)

    # ---- Test 1/2: spec-like small shape (batch=2, seq=8, hidden=32) ----
    B, S, H = 2, 8, 32
    x = jax.random.normal(keys[0], (B, S, H), dtype=jnp.float32)
    w1 = jax.random.normal(keys[1], (H, H), dtype=jnp.float32) * 0.05
    b1 = jax.random.normal(keys[2], (H,), dtype=jnp.float32) * 0.05
    gamma = 1.0 + 0.1 * jax.random.normal(keys[3], (H,), dtype=jnp.float32)
    beta = 0.1 * jax.random.normal(keys[4], (H,), dtype=jnp.float32)
    w2 = jax.random.normal(keys[5], (H,), dtype=jnp.float32) * 0.05
    b2 = jax.random.normal(keys[6], (1,), dtype=jnp.float32) * 0.05

    ref = itm_prediction_ref(x, w1, b1, gamma, beta, w2, b2)

    # f32 MXU path (matches PyTorch numerics closely).
    out_f32 = jax.block_until_ready(
        itm_prediction(x, w1, b1, gamma, beta, w2, b2, compute_dtype=jnp.float32))
    assert out_f32.shape == (B, S, 1), out_f32.shape
    assert jnp.allclose(out_f32, ref, atol=5e-5, rtol=5e-5), \
        float(jnp.max(jnp.abs(out_f32 - ref)))

    # Default path: bf16 MXU inputs, f32 accumulation + f32 epilogue (loose bound).
    out_bf16 = jax.block_until_ready(itm_prediction(x, w1, b1, gamma, beta, w2, b2))
    assert out_bf16.shape == (B, S, 1), out_bf16.shape
    assert jnp.allclose(out_bf16, ref, atol=1e-1, rtol=1e-1), \
        float(jnp.max(jnp.abs(out_bf16 - ref)))

    # ---- Test 3: exercise the K-tiled contraction path (H=256, tk=128 -> 2 K steps) ----
    B2, S2, H2 = 2, 128, 256
    x2 = jax.random.normal(keys[7], (B2, S2, H2), dtype=jnp.float32)
    w1_2 = jax.random.normal(keys[8], (H2, H2), dtype=jnp.float32) * 0.05
    b1_2 = jax.random.normal(keys[9], (H2,), dtype=jnp.float32) * 0.05
    gamma2 = 1.0 + 0.1 * jax.random.normal(keys[10], (H2,), dtype=jnp.float32)
    beta2 = 0.1 * jax.random.normal(keys[11], (H2,), dtype=jnp.float32)
    w2_2 = jax.random.normal(keys[0], (H2,), dtype=jnp.float32) * 0.05
    b2_2 = jnp.array([0.02], dtype=jnp.float32)

    ref2 = itm_prediction_ref(x2, w1_2, b1_2, gamma2, beta2, w2_2, b2_2)
    out2 = jax.block_until_ready(
        itm_prediction(x2, w1_2, b1_2, gamma2, beta2, w2_2, b2_2,
                       compute_dtype=jnp.float32, tk=128))
    assert out2.shape == (B2, S2, 1), out2.shape
    assert jnp.allclose(out2, ref2, atol=5e-4, rtol=5e-4), \
        float(jnp.max(jnp.abs(out2 - ref2)))

    print("KERNEL_OK")
</pallas_src>

<mosaic_0001>
module attributes {stable_mosaic.version = 11 : i64} {
  func.func @itm_kernel_single(%arg0: i32, %arg1: i32, %arg2: memref<8x32xf32, #tpu.memory_space<vmem>>, %arg3: memref<32x32xf32, #tpu.memory_space<vmem>>, %arg4: memref<1x32xf32, #tpu.memory_space<vmem>>, %arg5: memref<1x32xf32, #tpu.memory_space<vmem>>, %arg6: memref<1x1xf32, #tpu.memory_space<vmem>>, %arg7: memref<8x1xf32, #tpu.memory_space<vmem>>) attributes {dimension_semantics = [#tpu.dimension_semantics<parallel>, #tpu.dimension_semantics<arbitrary>], iteration_bounds = array<i64: 2, 1>, scalar_prefetch = 0 : i64, scratch_operands = 0 : i64, tpu.core_type = #tpu.core_type<tc>, window_params = [{transform_indices = @transform_0, window_bounds = array<i64: 8, 32>}, {pipeline_mode = #tpu.pipeline_mode<synchronous>, transform_indices = @transform_1, window_bounds = array<i64: 32, 32>}, {pipeline_mode = #tpu.pipeline_mode<synchronous>, transform_indices = @transform_2, window_bounds = array<i64: 1, 32>}, {pipeline_mode = #tpu.pipeline_mode<synchronous>, transform_indices = @transform_3, window_bounds = array<i64: 1, 32>}, {pipeline_mode = #tpu.pipeline_mode<synchronous>, transform_indices = @transform_4, window_bounds = array<i64: 1, 1>}, {transform_indices = @transform_5, window_bounds = array<i64: 8, 1>}]} {
    %c0 = arith.constant 0 : index
    %c0_0 = arith.constant 0 : index
    %0 = vector.load %arg2[%c0, %c0_0] : memref<8x32xf32, #tpu.memory_space<vmem>>, vector<8x32xf32>
    %c0_1 = arith.constant 0 : index
    %c0_2 = arith.constant 0 : index
    %1 = vector.load %arg3[%c0_1, %c0_2] : memref<32x32xf32, #tpu.memory_space<vmem>>, vector<32x32xf32>
    %cst = arith.constant dense<0.000000e+00> : vector<8x32xf32>
    %2 = tpu.matmul %0, %1, %cst {dimension_numbers = #tpu.dot_dimension_numbers<[1], [0], [0], [1], [0, 0, 1, 1], [], []>} : vector<8x32xf32>, vector<32x32xf32>, vector<8x32xf32> -> vector<8x32xf32>
    %c0_3 = arith.constant 0 : index
    %c0_4 = arith.constant 0 : index
    %3 = vector.load %arg4[%c0_3, %c0_4] : memref<1x32xf32, #tpu.memory_space<vmem>>, vector<1x32xf32>
    %4 = vector.broadcast %3 : vector<1x32xf32> to vector<8x32xf32>
    %5 = arith.addf %2, %4 : vector<8x32xf32>
    %cst_5 = arith.constant 0.000000e+00 : f32
    %6 = vector.broadcast %cst_5 : f32 to vector<8x32xf32>
    %7 = arith.maximumf %5, %6 : vector<8x32xf32>
    %cst_6 = arith.constant dense<0.000000e+00> : vector<8xf32>
    %8 = vector.multi_reduction <add>, %7, %cst_6 [1] : vector<8x32xf32> to vector<8xf32>
    %9 = vector.shape_cast %8 : vector<8xf32> to vector<8x1xf32>
    %cst_7 = arith.constant 3.125000e-02 : f32
    %10 = vector.broadcast %cst_7 : f32 to vector<8x1xf32>
    %11 = arith.mulf %9, %10 : vector<8x1xf32>
    %12 = vector.broadcast %11 : vector<8x1xf32> to vector<8x32xf32>
    %13 = arith.subf %7, %12 : vector<8x32xf32>
    %14 = arith.mulf %13, %13 : vector<8x32xf32>
    %cst_8 = arith.constant dense<0.000000e+00> : vector<8xf32>
    %15 = vector.multi_reduction <add>, %14, %cst_8 [1] : vector<8x32xf32> to vector<8xf32>
    %16 = vector.shape_cast %15 : vector<8xf32> to vector<8x1xf32>
    %cst_9 = arith.constant 3.125000e-02 : f32
    %17 = vector.broadcast %cst_9 : f32 to vector<8x1xf32>
    %18 = arith.mulf %16, %17 : vector<8x1xf32>
    %c0_10 = arith.constant 0 : index
    %c0_11 = arith.constant 0 : index
    %19 = vector.load %arg5[%c0_10, %c0_11] : memref<1x32xf32, #tpu.memory_space<vmem>>, vector<1x32xf32>
    %20 = vector.broadcast %19 : vector<1x32xf32> to vector<8x32xf32>
    %21 = arith.mulf %13, %20 : vector<8x32xf32>
    %cst_12 = arith.constant dense<0.000000e+00> : vector<8xf32>
    %22 = vector.multi_reduction <add>, %21, %cst_12 [1] : vector<8x32xf32> to vector<8xf32>
    %23 = vector.shape_cast %22 : vector<8xf32> to vector<8x1xf32>
    %cst_13 = arith.constant 9.99999996E-13 : f32
    %24 = vector.broadcast %cst_13 : f32 to vector<8x1xf32>
    %25 = arith.addf %18, %24 : vector<8x1xf32>
    %26 = math.rsqrt %25 : vector<8x1xf32>
    %27 = arith.mulf %23, %26 : vector<8x1xf32>
    %c0_14 = arith.constant 0 : index
    %c0_15 = arith.constant 0 : index
    %28 = vector.load %arg6[%c0_14, %c0_15] : memref<1x1xf32, #tpu.memory_space<vmem>>, vector<1x1xf32>
    %29 = vector.broadcast %28 : vector<1x1xf32> to vector<8x1xf32>
    %30 = arith.addf %27, %29 : vector<8x1xf32>
    %c0_16 = arith.constant 0 : index
    %c0_17 = arith.constant 0 : index
    %31 = vector.load %arg7[%c0_16, %c0_17] : memref<8x1xf32, #tpu.memory_space<vmem>>, vector<8x1xf32>
    tpu.vector_store %arg7[%c0_16, %c0_17], %30 {strides = array<i32>} : memref<8x1xf32, #tpu.memory_space<vmem>>, vector<8x1xf32>,
    return
  }
  func.func @transform_0(%arg0: i32, %arg1: i32) -> (i32, i32) {
    %c0_i32 = arith.constant 0 : i32
    return %arg0, %arg1 : i32, i32
  }
  func.func @transform_1(%arg0: i32, %arg1: i32) -> (i32, i32) {
    %c0_i32 = arith.constant 0 : i32
    %c0_i32_0 = arith.constant 0 : i32
    %c0_i32_1 = arith.constant 0 : i32
    return %c0_i32, %c0_i32_0 : i32, i32
  }
  func.func @transform_2(%arg0: i32, %arg1: i32) -> (i32, i32) {
    %c0_i32 = arith.constant 0 : i32
    %c0_i32_0 = arith.constant 0 : i32
    %c0_i32_1 = arith.constant 0 : i32
    return %c0_i32, %c0_i32_0 : i32, i32
  }
  func.func @transform_3(%arg0: i32, %arg1: i32) -> (i32, i32) {
    %c0_i32 = arith.constant 0 : i32
    %c0_i32_0 = arith.constant 0 : i32
    %c0_i32_1 = arith.constant 0 : i32
    return %c0_i32, %c0_i32_0 : i32, i32
  }
  func.func @transform_4(%arg0: i32, %arg1: i32) -> (i32, i32) {
    %c0_i32 = arith.constant 0 : i32
    %c0_i32_0 = arith.constant 0 : i32
    %c0_i32_1 = arith.constant 0 : i32
    return %c0_i32, %c0_i32_0 : i32, i32
  }
  func.func @transform_5(%arg0: i32, %arg1: i32) -> (i32, i32) {
    %c0_i32 = arith.constant 0 : i32
    %c0_i32_0 = arith.constant 0 : i32
    return %arg0, %c0_i32 : i32, i32
  }
}

module attributes {stable_mosaic.version = 11 : i64} {
  func.func @itm_kernel_single(%arg0: i32, %arg1: i32, %arg2: memref<8x32xf32, #tpu.memory_space<vmem>>, %arg3: memref<32x32xf32, #tpu.memory_space<vmem>>, %arg4: memref<1x32xf32, #tpu.memory_space<vmem>>, %arg5: memref<1x32xf32, #tpu.memory_space<vmem>>, %arg6: memref<1x1xf32, #tpu.memory_space<vmem>>, %arg7: memref<8x1xf32, #tpu.memory_space<vmem>>) attributes {dimension_semantics = [#tpu.dimension_semantics<parallel>, #tpu.dimension_semantics<arbitrary>], iteration_bounds = array<i64: 2, 1>, scalar_prefetch = 0 : i64, scratch_operands = 0 : i64, tpu.core_type = #tpu.core_type<tc>, window_params = [{transform_indices = @transform_0, window_bounds = array<i64: 8, 32>}, {pipeline_mode = #tpu.pipeline_mode<synchronous>, transform_indices = @transform_1, window_bounds = array<i64: 32, 32>}, {pipeline_mode = #tpu.pipeline_mode<synchronous>, transform_indices = @transform_2, window_bounds = array<i64: 1, 32>}, {pipeline_mode = #tpu.pipeline_mode<synchronous>, transform_indices = @transform_3, window_bounds = array<i64: 1, 32>}, {pipeline_mode = #tpu.pipeline_mode<synchronous>, transform_indices = @transform_4, window_bounds = array<i64: 1, 1>}, {transform_indices = @transform_5, window_bounds = array<i64: 8, 1>}]} {
    %c0 = arith.constant 0 : index
    %c0_0 = arith.constant 0 : index
    %0 = vector.load %arg2[%c0, %c0_0] : memref<8x32xf32, #tpu.memory_space<vmem>>, vector<8x32xf32>
    %c0_1 = arith.constant 0 : index
    %c0_2 = arith.constant 0 : index
    %1 = vector.load %arg3[%c0_1, %c0_2] : memref<32x32xf32, #tpu.memory_space<vmem>>, vector<32x32xf32>
    %cst = arith.constant dense<0.000000e+00> : vector<8x32xf32>
    %2 = tpu.matmul %0, %1, %cst {dimension_numbers = #tpu.dot_dimension_numbers<[1], [0], [0], [1], [0, 0, 1, 1], [], []>} : vector<8x32xf32>, vector<32x32xf32>, vector<8x32xf32> -> vector<8x32xf32>
    %c0_3 = arith.constant 0 : index
    %c0_4 = arith.constant 0 : index
    %3 = vector.load %arg4[%c0_3, %c0_4] : memref<1x32xf32, #tpu.memory_space<vmem>>, vector<1x32xf32>
    %4 = vector.broadcast %3 : vector<1x32xf32> to vector<8x32xf32>
    %5 = arith.addf %2, %4 : vector<8x32xf32>
    %cst_5 = arith.constant 0.000000e+00 : f32
    %6 = vector.broadcast %cst_5 : f32 to vector<8x32xf32>
    %7 = arith.maximumf %5, %6 : vector<8x32xf32>
    %cst_6 = arith.constant dense<0.000000e+00> : vector<8xf32>
    %8 = vector.multi_reduction <add>, %7, %cst_6 [1] : vector<8x32xf32> to vector<8xf32>
    %9 = vector.shape_cast %8 : vector<8xf32> to vector<8x1xf32>
    %cst_7 = arith.constant 3.125000e-02 : f32
    %10 = vector.broadcast %cst_7 : f32 to vector<8x1xf32>
    %11 = arith.mulf %9, %10 : vector<8x1xf32>
    %12 = vector.broadcast %11 : vector<8x1xf32> to vector<8x32xf32>
    %13 = arith.subf %7, %12 : vector<8x32xf32>
    %14 = arith.mulf %13, %13 : vector<8x32xf32>
    %cst_8 = arith.constant dense<0.000000e+00> : vector<8xf32>
    %15 = vector.multi_reduction <add>, %14, %cst_8 [1] : vector<8x32xf32> to vector<8xf32>
    %16 = vector.shape_cast %15 : vector<8xf32> to vector<8x1xf32>
    %cst_9 = arith.constant 3.125000e-02 : f32
    %17 = vector.broadcast %cst_9 : f32 to vector<8x1xf32>
    %18 = arith.mulf %16, %17 : vector<8x1xf32>
    %c0_10 = arith.constant 0 : index
    %c0_11 = arith.constant 0 : index
    %19 = vector.load %arg5[%c0_10, %c0_11] : memref<1x32xf32, #tpu.memory_space<vmem>>, vector<1x32xf32>
    %20 = vector.broadcast %19 : vector<1x32xf32> to vector<8x32xf32>
    %21 = arith.mulf %13, %20 : vector<8x32xf32>
    %cst_12 = arith.constant dense<0.000000e+00> : vector<8xf32>
    %22 = vector.multi_reduction <add>, %21, %cst_12 [1] : vector<8x32xf32> to vector<8xf32>
    %23 = vector.shape_cast %22 : vector<8xf32> to vector<8x1xf32>
    %cst_13 = arith.constant 9.99999996E-13 : f32
    %24 = vector.broadcast %cst_13 : f32 to vector<8x1xf32>
    %25 = arith.addf %18, %24 : vector<8x1xf32>
    %26 = math.rsqrt %25 : vector<8x1xf32>
    %27 = arith.mulf %23, %26 : vector<8x1xf32>
    %c0_14 = arith.constant 0 : index
    %c0_15 = arith.constant 0 : index
    %28 = vector.load %arg6[%c0_14, %c0_15] : memref<1x1xf32, #tpu.memory_space<vmem>>, vector<1x1xf32>
    %29 = vector.broadcast %28 : vector<1x1xf32> to vector<8x1xf32>
    %30 = arith.addf %27, %29 : vector<8x1xf32>
    %c0_16 = arith.constant 0 : index
    %c0_17 = arith.constant 0 : index
    %31 = vector.load %arg7[%c0_16, %c0_17] : memref<8x1xf32, #tpu.memory_space<vmem>>, vector<8x1xf32>
    tpu.vector_store %arg7[%c0_16, %c0_17], %30 {strides = array<i32>} : memref<8x1xf32, #tpu.memory_space<vmem>>, vector<8x1xf32>,
    return
  }
  func.func @transform_0(%arg0: i32, %arg1: i32) -> (i32, i32) {
    %c0_i32 = arith.constant 0 : i32
    return %arg0, %arg1 : i32, i32
  }
  func.func @transform_1(%arg0: i32, %arg1: i32) -> (i32, i32) {
    %c0_i32 = arith.constant 0 : i32
    %c0_i32_0 = arith.constant 0 : i32
    %c0_i32_1 = arith.constant 0 : i32
    return %c0_i32, %c0_i32_0 : i32, i32
  }
  func.func @transform_2(%arg0: i32, %arg1: i32) -> (i32, i32) {
    %c0_i32 = arith.constant 0 : i32
    %c0_i32_0 = arith.constant 0 : i32
    %c0_i32_1 = arith.constant 0 : i32
    return %c0_i32, %c0_i32_0 : i32, i32
  }
  func.func @transform_3(%arg0: i32, %arg1: i32) -> (i32, i32) {
    %c0_i32 = arith.constant 0 : i32
    %c0_i32_0 = arith.constant 0 : i32
    %c0_i32_1 = arith.constant 0 : i32
    return %c0_i32, %c0_i32_0 : i32, i32
  }
  func.func @transform_4(%arg0: i32, %arg1: i32) -> (i32, i32) {
    %c0_i32 = arith.constant 0 : i32
    %c0_i32_0 = arith.constant 0 : i32
    %c0_i32_1 = arith.constant 0 : i32
    return %c0_i32, %c0_i32_0 : i32, i32
  }
  func.func @transform_5(%arg0: i32, %arg1: i32) -> (i32, i32) {
    %c0_i32 = arith.constant 0 : i32
    %c0_i32_0 = arith.constant 0 : i32
    return %arg0, %c0_i32 : i32, i32
  }
}

</mosaic_0001>

<llo_original>
// kernel: tpu_custom_call.1
$region0: #{tpu_custom_call.1}
  #allocation0 [shape = 'u32[]', space=smem, size = 0x4, offset = 0x4, fixed_abs, tag = 'smem constant byte address 0x4 - core index']
  #allocation1 [shape = 'u32[144,128]{1,0:T(1,128)}', space=vmem, size = 0x12000, scoped, tag = 'internal scratch']
  #allocation2 [shape = 'f32[1,1]{1,0:T(1,128)S(1)}', space=vmem, size = 0x200, scoped, tag = 'scoped memory for tpu_custom_call.1']
  %s0 = inlined_call_operand.hbm [shape: f32[16,32], index: 0, kind: input, shape index: {}]
  %s1 = inlined_call_operand.hbm [shape: f32[32,32], index: 1, kind: input, shape index: {}]
  %s2 = inlined_call_operand.vmem [shape: f32[1,32], index: 2, kind: input, shape index: {}]
  %s3 = inlined_call_operand.vmem [shape: f32[1,32], index: 3, kind: input, shape index: {}]
  %s4 = inlined_call_operand.<no memory space> [shape: f32[1,1], index: 4, kind: input, shape index: {}]
  %s5 = inlined_call_operand.vmem [shape: f32[16,1], index: 5, kind: output, shape index: {}]
  %s6 = sld [smem:[#allocation0]]
  $region61: #{tpu_custom_call.1} parent=0
    _
  %s8 = ssub.s32 1, %s6
  %s9 = scalar_select 0, %s8, %s6
  %v10 = vstv %s4
  %11 = vst [vmem:[#allocation2] sm:$0x1] %v10
  $region1: #{tpu_custom_call.1} parent=0
    #allocation3 [shape = 'u8[8192]{0}', space=vmem, size = 0x2000, scoped, tag = 'input window, operand 0']
    #allocation4 [shape = 's32[2]{0}', space=sflag, size = 0x8, scoped, tag = 'scoped memory for tpu_custom_call.1']
    #allocation5 [shape = 'u8[16384]{0}', space=vmem, size = 0x4000, scoped, tag = 'input window, operand 1, single buffered']
    #allocation6 [shape = 's32[1]{0}', space=sflag, size = 0x4, scoped, tag = 'scoped memory for tpu_custom_call.1']
    %12 = vsyncpa [#allocation4], 0
    %s13 = scalar_lea.sflag [#allocation4], 1
    %14 = vsyncpa %s13, 0
    %15 = vsyncpa [#allocation6], 0
    loop: start=0, step=1, limit=4
    $region2: #{tpu_custom_call.1} parent=1 // loop_pre_header
      _
    $region3: #{tpu_custom_call.1} parent=1 // loop_header
      %s17 = sphi 0, %s21
      %p18 = scmp.ge.s32.totalorder %s17, 4
      %s24 = sphi 0, %s36
      %s25 = sphi 0, %s32
      %s26 = sphi 0, %s24
      %s27 = sphi 0, %s25
      %s28 = sphi 0, %s26
      %s29 = sphi 0, %s27
      %s41 = sphi 0, %s43
      %s44 = sphi 0, %s41
      %s45 = sphi 0, %s44
      %s61 = sphi 0, %s45
      %s65 = sphi 0, %s65
      %s67 = sphi 0, %s65
      %s68 = sphi 0, %s67
      %s82 = sphi 0, %s68
      %s86 = sphi 0, %s86
      %s88 = sphi 0, %s86
      %s89 = sphi 0, %s88
      %s103 = sphi 0, %s89
      %s107 = sphi 0, %s107
      %s109 = sphi 0, %s107
      %s110 = sphi 0, %s109
      %s124 = sphi 0, %s110
      %s128 = sphi 0, %s128
      %s130 = sphi 0, %s128
      %s131 = sphi 0, %s130
      %s145 = sphi 0, %s131
      %s151 = sphi 0, %s153
      %s154 = sphi 0, %s151
      %s155 = sphi 0, %s154
      %s171 = sphi 0, %s155
    $region4: #{tpu_custom_call.1} parent=1 // loop_header_branch
      %20 = sbr.rel (%p18) target = $region8
    $region5: #{tpu_custom_call.1} parent=1 // loop_body
      %s22 = ssub.s32 %s17, 1
      %s23 = ssub.s32 %s17, 2
      %s30 = sadd.s32 1, %s25
      %p31 = scmp.ge.s32.totalorder %s30, 1
      %s32 = scalar_select %p31, 0, %s30
      %s33 = sadd.s32 1, %s24
      %s34 = scalar_select %p31, %s33, %s24
      %p35 = scmp.ge.s32.totalorder %s34, 2
      %s36 = scalar_select %p35, 0, %s34
      %s37 = ssub.s32 %s24, %s36
      %s38 = ssub.s32 %s25, %s32
      %s39 = sor.u32 %s37, %s38
      %p40 = scmp.eq.s32.totalorder %s39, 0
      %s42 = sadd.s32 %s41, 1
      %s43 = scalar_select %p40, %s41, %s42
      %p46 = pneg %p40
      %p47 = scmp.eq.s32.totalorder %s17, 1
      %p48 = por %p46, %p47
      %p49 = scmp.ne.s32.totalorder %s41, %s44
      %p50 = scmp.eq.s32.totalorder %s17, 0
      %p51 = por %p49, %p50
      %p52 = scmp.ne.s32.totalorder %s41, %s44
      %p53 = scmp.eq.s32.totalorder %s22, 1
      %p54 = por %p52, %p53
      %p55 = scmp.ne.s32.totalorder %s44, %s45
      %p56 = scmp.eq.s32.totalorder %s22, 0
      %p57 = por %p55, %p56
      %p58 = scmp.ne.s32.totalorder %s44, %s45
      %p59 = scmp.eq.s32.totalorder %s23, 1
      %p60 = por %p58, %p59
      %p62 = scmp.ne.s32.totalorder %s45, %s61
      %p63 = scmp.eq.s32.totalorder %s23, 0
      %p64 = por %p62, %p63
      %s66 = sadd.s32 %s65, 1
      %p69 = scmp.eq.s32.totalorder %s17, 1
      %p70 = scmp.ne.s32.totalorder %s65, %s67
      %p71 = scmp.eq.s32.totalorder %s17, 0
      %p72 = por %p70, %p71
      %p73 = scmp.ne.s32.totalorder %s65, %s67
      %p74 = scmp.eq.s32.totalorder %s22, 1
      %p75 = por %p73, %p74
      %p76 = scmp.ne.s32.totalorder %s67, %s68
      %p77 = scmp.eq.s32.totalorder %s22, 0
      %p78 = por %p76, %p77
      %p79 = scmp.ne.s32.totalorder %s67, %s68
      %p80 = scmp.eq.s32.totalorder %s23, 1
      %p81 = por %p79, %p80
      %p83 = scmp.ne.s32.totalorder %s68, %s82
      %p84 = scmp.eq.s32.totalorder %s23, 0
      %p85 = por %p83, %p84
      %s87 = sadd.s32 %s86, 1
      %p90 = scmp.eq.s32.totalorder %s17, 1
      %p91 = scmp.ne.s32.totalorder %s86, %s88
      %p92 = scmp.eq.s32.totalorder %s17, 0
      %p93 = por %p91, %p92
      %p94 = scmp.ne.s32.totalorder %s86, %s88
      %p95 = scmp.eq.s32.totalorder %s22, 1
      %p96 = por %p94, %p95
      %p97 = scmp.ne.s32.totalorder %s88, %s89
      %p98 = scmp.eq.s32.totalorder %s22, 0
      %p99 = por %p97, %p98
      %p100 = scmp.ne.s32.totalorder %s88, %s89
      %p101 = scmp.eq.s32.totalorder %s23, 1
      %p102 = por %p100, %p101
      %p104 = scmp.ne.s32.totalorder %s89, %s103
      %p105 = scmp.eq.s32.totalorder %s23, 0
      %p106 = por %p104, %p105
      %s108 = sadd.s32 %s107, 1
      %p111 = scmp.eq.s32.totalorder %s17, 1
      %p112 = scmp.ne.s32.totalorder %s107, %s109
      %p113 = scmp.eq.s32.totalorder %s17, 0
      %p114 = por %p112, %p113
      %p115 = scmp.ne.s32.totalorder %s107, %s109
      %p116 = scmp.eq.s32.totalorder %s22, 1
      %p117 = por %p115, %p116
      %p118 = scmp.ne.s32.totalorder %s109, %s110
      %p119 = scmp.eq.s32.totalorder %s22, 0
      %p120 = por %p118, %p119
      %p121 = scmp.ne.s32.totalorder %s109, %s110
      %p122 = scmp.eq.s32.totalorder %s23, 1
      %p123 = por %p121, %p122
      %p125 = scmp.ne.s32.totalorder %s110, %s124
      %p126 = scmp.eq.s32.totalorder %s23, 0
      %p127 = por %p125, %p126
      %s129 = sadd.s32 %s128, 1
      %p132 = scmp.eq.s32.totalorder %s17, 1
      %p133 = scmp.ne.s32.totalorder %s128, %s130
      %p134 = scmp.eq.s32.totalorder %s17, 0
      %p135 = por %p133, %p134
      %p136 = scmp.ne.s32.totalorder %s128, %s130
      %p137 = scmp.eq.s32.totalorder %s22, 1
      %p138 = por %p136, %p137
      %p139 = scmp.ne.s32.totalorder %s130, %s131
      %p140 = scmp.eq.s32.totalorder %s22, 0
      %p141 = por %p139, %p140
      %p142 = scmp.ne.s32.totalorder %s130, %s131
      %p143 = scmp.eq.s32.totalorder %s23, 1
      %p144 = por %p142, %p143
      %p146 = scmp.ne.s32.totalorder %s131, %s145
      %p147 = scmp.eq.s32.totalorder %s23, 0
      %p148 = por %p146, %p147
      %s149 = ssub.s32 %s24, %s36
      %p150 = scmp.eq.s32.totalorder %s149, 0
      %s152 = sadd.s32 %s151, 1
      %s153 = scalar_select %p150, %s151, %s152
      %p156 = pneg %p150
      %p157 = scmp.eq.s32.totalorder %s17, 1
      %p158 = por %p156, %p157
      %p159 = scmp.ne.s32.totalorder %s151, %s154
      %p160 = scmp.eq.s32.totalorder %s17, 0
      %p161 = por %p159, %p160
      %p162 = scmp.ne.s32.totalorder %s151, %s154
      %p163 = scmp.eq.s32.totalorder %s22, 1
      %p164 = por %p162, %p163
      %p165 = scmp.ne.s32.totalorder %s154, %s155
      %p166 = scmp.eq.s32.totalorder %s22, 0
      %p167 = por %p165, %p166
      %p168 = scmp.ne.s32.totalorder %s154, %s155
      %p169 = scmp.eq.s32.totalorder %s23, 1
      %p170 = por %p168, %p169
      %p172 = scmp.ne.s32.totalorder %s155, %s171
      %p173 = scmp.eq.s32.totalorder %s23, 0
      %p174 = por %p172, %p173
      %p175 = scmp.le.s32.totalorder 1, %s17
      %p176 = scmp.lt.s32.totalorder %s17, 3
      %p177 = pnand %p175, %p176
      %p178 = pneg %p177
      // Predicated region
      $region9: #{tpu_custom_call.1} parent=5 // pred_check
        _
      $region10: #{tpu_custom_call.1} parent=5 // pred_check_branch
        %180 = sbr.rel (%p177) target = $region12
      $region11: #{tpu_custom_call.1} parent=5 // pred_region
        %s181 = ssub.s32 %s17, 1
        // Predicated region
        $region13: #{tpu_custom_call.1} parent=11 // pred_check
          %p182 = pneg %p78
        $region14: #{tpu_custom_call.1} parent=11 // pred_check_branch
          %184 = sbr.rel (%p182) target = $region16
        $region15: #{tpu_custom_call.1} parent=11 // pred_region
          %s186 = ssub.s32 512, 512
          %187 = vsyncadd [#allocation6], %s186
          %s188 = sshll.u32 [#allocation5], 4
          %s189 = int_to_ptr.vmem [resolvable:$true] %s188
          %194 = dma.hbm_to_vmem [thread:$0]  %s1, 512, %s189, [#allocation6], 128, 128, 8
        $region16: #{tpu_custom_call.1} parent=11 // pred_fallthru
          _
        // Predicated region
        $region17: #{tpu_custom_call.1} parent=11 // pred_check
          %p195 = pneg %p99
        $region18: #{tpu_custom_call.1} parent=11 // pred_check_branch
          %197 = sbr.rel (%p195) target = $region20
        $region19: #{tpu_custom_call.1} parent=11 // pred_region
          _
        $region20: #{tpu_custom_call.1} parent=11 // pred_fallthru
          _
        // Predicated region
        $region21: #{tpu_custom_call.1} parent=11 // pred_check
          %p198 = pneg %p120
        $region22: #{tpu_custom_call.1} parent=11 // pred_check_branch
          %200 = sbr.rel (%p198) target = $region24
        $region23: #{tpu_custom_call.1} parent=11 // pred_region
          _
        $region24: #{tpu_custom_call.1} parent=11 // pred_fallthru
          _
        // Predicated region
        $region25: #{tpu_custom_call.1} parent=11 // pred_check
          %p201 = pneg %p141
        $region26: #{tpu_custom_call.1} parent=11 // pred_check_branch
          %203 = sbr.rel (%p201) target = $region28
        $region27: #{tpu_custom_call.1} parent=11 // pred_region
          _
        $region28: #{tpu_custom_call.1} parent=11 // pred_fallthru
          _
      $region12: #{tpu_custom_call.1} parent=5 // pred_fallthru
        _
      %p204 = scmp.lt.s32.totalorder %s17, 2
      // Predicated region
      $region29: #{tpu_custom_call.1} parent=5 // pred_check
        %p205 = pneg %p204
      $region30: #{tpu_custom_call.1} parent=5 // pred_check_branch
        %207 = sbr.rel (%p205) target = $region32
      $region31: #{tpu_custom_call.1} parent=5 // pred_region
        // Predicated region
        $region33: #{tpu_custom_call.1} parent=31 // pred_check
          %p208 = pneg %p51
        $region34: #{tpu_custom_call.1} parent=31 // pred_check_branch
          %210 = sbr.rel (%p208) target = $region36
        $region35: #{tpu_custom_call.1} parent=31 // pred_region
          %s211 = sand.u32 %s41, 1
          %s212 = scalar_lea.sflag [#allocation4], %s211
          %s213 = sand.u32 %s41, 1
          %s214 = smul.addr %s213, 8
          %s215 = scalar_lea.vmem [#allocation3], %s214
          %s217 = ssub.s32 128, 128
          %218 = vsyncadd %s212, %s217
          %s219 = sadd.s32 %s25, %s24
          %s220 = smul.addr %s219, 128
          %s221 = scalar_lea.hbm %s0, %s220
          %s223 = sshll.u32 %s215, 4
          %s224 = int_to_ptr.vmem [resolvable:$true] %s223
          %226 = dma.hbm_to_vmem [thread:$0]  %s221, 128, %s224, %s212
        $region36: #{tpu_custom_call.1} parent=31 // pred_fallthru
          _
      $region32: #{tpu_custom_call.1} parent=5 // pred_fallthru
        _
      %p227 = scmp.le.s32.totalorder 1, %s17
      %p228 = scmp.lt.s32.totalorder %s17, 3
      %p229 = pnand %p227, %p228
      %p230 = pneg %p229
      // Predicated region
      $region37: #{tpu_custom_call.1} parent=5 // pred_check
        _
      $region38: #{tpu_custom_call.1} parent=5 // pred_check_branch
        %232 = sbr.rel (%p229) target = $region40
      $region39: #{tpu_custom_call.1} parent=5 // pred_region
        %s233 = ssub.s32 %s17, 1
        %s234 = sand.u32 %s44, 1
        %s235 = scalar_lea.sflag [#allocation4], %s234
        %s236 = sand.u32 %s44, 1
        %s237 = smul.addr %s236, 8
        %s238 = scalar_lea.vmem [#allocation3], %s237
        // Predicated region
        $region41: #{tpu_custom_call.1} parent=39 // pred_check
          %p239 = pneg %p57
        $region42: #{tpu_custom_call.1} parent=39 // pred_check_branch
          %241 = sbr.rel (%p239) target = $region44
        $region43: #{tpu_custom_call.1} parent=39 // pred_region
          %242 = dma.done %s235, 128
        $region44: #{tpu_custom_call.1} parent=39 // pred_fallthru
          _
        // Predicated region
        $region45: #{tpu_custom_call.1} parent=39 // pred_check
          %p243 = pneg %p78
        $region46: #{tpu_custom_call.1} parent=39 // pred_check_branch
          %245 = sbr.rel (%p243) target = $region48
        $region47: #{tpu_custom_call.1} parent=39 // pred_region
          %246 = dma.done [#allocation6], 512
        $region48: #{tpu_custom_call.1} parent=39 // pred_fallthru
          _
        %s247 = sand.u32 %s44, 1
        %s248 = scalar_lea.sflag [#allocation4], %s247
        %s249 = sand.u32 %s44, 1
        %s250 = smul.addr %s249, 8
        %s251 = scalar_lea.vmem [#allocation3], %s250
        %p252 = pneg %p57
        %p253 = pneg %p54
        %p254 = pneg %p78
        %p255 = pneg %p75
        %p256 = pneg %p99
        %p257 = pneg %p96
        %p258 = pneg %p120
        %p259 = pneg %p117
        %p260 = pneg %p141
        %p261 = pneg %p138
        %p262 = pneg %p167
        %p263 = pneg %p164
        %p264 = scmp.lt.s32.totalorder %s26, 1
        %s265 = scalar_select %p264, %s26, 1
        %s266 = smul.addr %s265, 8
        %s267 = scalar_lea.vmem %s5, %s266
        %p268 = scmp.lt.s32.totalorder %s26, 1
        %s269 = scalar_select %p268, %s26, 1
        %s270 = smul.addr %s269, 8
        %s271 = scalar_lea.vmem %s5, %s270
        %v272 = vld [vmem:[%s238] sm:$0xff]
        %v273 = vld [vmem:[#allocation5] sm:$0xff]
        %v274 = vld [vmem:[#allocation5 + $0x8] sm:$0xff]
        %v275 = vld [vmem:[#allocation5 + $0x10] sm:$0xff]
        %v276 = vld [vmem:[#allocation5 + $0x18] sm:$0xff]
        %v277 = vld [vmem:[%s2] sm:$0x1]
        %v279 = vlaneseq
        %v280 = vshrl.u32 %v279, 7
        %v281 = vsub.s32 0, %v280
        %v282 = vrot.slane %v277, %v281
        %vm284 = vcmask 261120
        %v286 = vsel %vm284, %v272, 0
        %288 = vmatprep.subr.mxu0 0.0
        %289 = vmatpush1.msra.mxu0 0.0
        %290 = vmatprep.subr.mxu0 0.0
        %291 = vmatpush1.msra.mxu0 0.0
        %292 = vmatprep.subr.mxu0 0.0
        %293 = vmatpush1.msra.mxu0 0.0
        %294 = vmatprep.subr.mxu0 0.0
        %295 = vmatpush1.msra.mxu0 0.0
        %296 = vmatprep.subr.mxu0 0.0
        %297 = vmatpush1.msra.mxu0 0.0
        %298 = vmatprep.subr.mxu0 0.0
        %299 = vmatpush1.msra.mxu0 0.0
        %300 = vmatprep.subr.mxu0 0.0
        %301 = vmatpush1.msra.mxu0 0.0
        %302 = vmatprep.subr.mxu0 0.0
        %303 = vmatpush1.msra.mxu0 0.0
        %304 = vmatprep.subr.mxu0 0.0
        %305 = vmatpush1.msra.mxu0 0.0
        %306 = vmatprep.subr.mxu0 0.0
        %307 = vmatpush1.msra.mxu0 0.0
        %308 = vmatprep.subr.mxu0 0.0
        %309 = vmatpush1.msra.mxu0 0.0
        %310 = vmatprep.subr.mxu0 0.0
        %311 = vmatpush1.msra.mxu0 0.0
        %312 = vmatprep.subr.mxu0 0.0
        %313 = vmatpush1.msra.mxu0 %v276
        %314 = vmatprep.subr.mxu0 0.0
        %315 = vmatpush1.msra.mxu0 %v275
        %316 = vmatprep.subr.mxu0 0.0
        %317 = vmatpush1.msra.mxu0 %v274
        %318 = vmatprep.subr.mxu0 0.0
        %319 = vmatpush1.msra.mxu0 %v273
        %320 = vmatprep.subr.mxu0 0.0
        %321 = vmatpush2.msra.mxu0 0.0
        %322 = vmatprep.subr.mxu0 0.0
        %323 = vmatpush2.msra.mxu0 0.0
        %324 = vmatprep.subr.mxu0 0.0
        %325 = vmatpush2.msra.mxu0 0.0
        %326 = vmatprep.subr.mxu0 0.0
        %327 = vmatpush2.msra.mxu0 0.0
        %328 = vmatprep.subr.mxu0 0.0
        %329 = vmatpush2.msra.mxu0 0.0
        %330 = vmatprep.subr.mxu0 0.0
        %331 = vmatpush2.msra.mxu0 0.0
        %332 = vmatprep.subr.mxu0 0.0
        %333 = vmatpush2.msra.mxu0 0.0
        %334 = vmatprep.subr.mxu0 0.0
        %335 = vmatpush2.msra.mxu0 0.0
        %336 = vmatprep.subr.mxu0 0.0
        %337 = vmatpush2.msra.mxu0 0.0
        %338 = vmatprep.subr.mxu0 0.0
        %339 = vmatpush2.msra.mxu0 0.0
        %340 = vmatprep.subr.mxu0 0.0
        %341 = vmatpush2.msra.mxu0 0.0
        %342 = vmatprep.subr.mxu0 0.0
        %343 = vmatpush2.msra.mxu0 0.0
        %344 = vmatprep.subr.mxu0 0.0
        %345 = vmatpush2.msra.mxu0 0.0
        %346 = vmatprep.subr.mxu0 0.0
        %347 = vmatpush2.msra.mxu0 0.0
        %348 = vmatprep.subr.mxu0 0.0
        %349 = vmatpush2.msra.mxu0 0.0
        %350 = vmatprep.subr.mxu0 0.0
        %351 = vmatpush2.msra.mxu0 0.0
        %352 = vmatprep.mubr.f32.mxu0 0.0
        %353 = vmatmul.mubr.f32.gmra.mxu0 %v286
        %v354 = vpop.f32.mrf.mxu0
        %v355 = vadd.f32 %v282, %v354
        %v356 = vpop.f32.mrf.mxu0
        %357 = vdwg.mxu0
        %v358 = vmax.f32 %v355, 0.0
        %v359 = vsel %vm284, %v358, 0.0
        %360 = vadd.xlane.f32.xlu0 %v359
        %v361 = vpop.xlane.xlu0 %360
        %v362 = vmul.f32 %v361, 0.03125
        %v363 = vsub.f32 %v358, %v362
        %v364 = vmul.f32 %v363, %v363
        %v365 = vsel %vm284, %v364, 0.0
        %366 = vadd.xlane.f32.xlu0 %v365
        %v367 = vpop.xlane.xlu0 %366
        %v368 = vmul.f32 %v367, 0.03125
        %v369 = vld [vmem:[%s3] sm:$0x1]
        %v371 = vlaneseq
        %v372 = vshrl.u32 %v371, 7
        %v373 = vsub.s32 0, %v372
        %v374 = vrot.slane %v369, %v373
        %v376 = vmul.f32 %v363, %v374
        %v377 = vsel %vm284, %v376, 0.0
        %378 = vadd.xlane.f32.xlu0 %v377
        %v379 = vpop.xlane.xlu0 %378
        %v380 = vadd.f32 %v368, 1e-12
        %v381 = vrsqrt.pop %v380
        %v382 = vmul.f32 %v379, %v381
        %v383 = vld [vmem:[#allocation2] sm:$0x1]
        %v385 = vlaneseq
        %v386 = vshrl.u32 %v385, 7
        %v387 = vsub.s32 0, %v386
        %v388 = vrot.slane %v383, %v387
        %v390 = vadd.f32 %v382, %v388
        %vm391 = vcmask 7168
        %392 = vst.msk [vmem:[%s271] sm:$0xff] %vm391, %v390
        %p393 = scmp.lt.s32.totalorder %s26, 1
        %s394 = scalar_select %p393, %s26, 1
        %s395 = smul.addr %s394, 8
        %s396 = scalar_lea.vmem %s5, %s395
        // Predicated region
        $region49: #{tpu_custom_call.1} parent=39 // pred_check
          %p397 = pneg %p164
        $region50: #{tpu_custom_call.1} parent=39 // pred_check_branch
          %399 = sbr.rel (%p397) target = $region52
        $region51: #{tpu_custom_call.1} parent=39 // pred_region
          _
        $region52: #{tpu_custom_call.1} parent=39 // pred_fallthru
          _
      $region40: #{tpu_custom_call.1} parent=5 // pred_fallthru
        _
      %p400 = scmp.le.s32.totalorder 2, %s17
      // Predicated region
      $region53: #{tpu_custom_call.1} parent=5 // pred_check
        %p401 = pneg %p400
      $region54: #{tpu_custom_call.1} parent=5 // pred_check_branch
        %403 = sbr.rel (%p401) target = $region56
      $region55: #{tpu_custom_call.1} parent=5 // pred_region
        %s404 = ssub.s32 %s17, 2
        // Predicated region
        $region57: #{tpu_custom_call.1} parent=55 // pred_check
          %p405 = pneg %p170
        $region58: #{tpu_custom_call.1} parent=55 // pred_check_branch
          %407 = sbr.rel (%p405) target = $region60
        $region59: #{tpu_custom_call.1} parent=55 // pred_region
          %p408 = scmp.lt.s32.totalorder %s28, 1
          %s409 = scalar_select %p408, %s28, 1
          %s410 = smul.addr %s409, 8
          %s411 = scalar_lea.vmem %s5, %s410
        $region60: #{tpu_custom_call.1} parent=55 // pred_fallthru
          _
      $region56: #{tpu_custom_call.1} parent=5 // pred_fallthru
        _
    $region6: #{tpu_custom_call.1} parent=1 // loop_footer
      %s21 = sadd.s32 1, %s17
    $region7: #{tpu_custom_call.1} parent=1 // loop_footer_branch
      %16 = sbr.rel target = $region3
    $region8: #{tpu_custom_call.1} parent=1 // loop_exit
      _
    %412 = vsyncpa [#allocation4], 1
    %s413 = scalar_lea.sflag [#allocation4], 1
    %414 = vsyncpa %s413, 1
    %415 = vsyncpa [#allocation6], 1

// kernel: tpu_custom_call.1
$region0: #{tpu_custom_call.1}
  #allocation0 [shape = 'u32[]', space=smem, size = 0x4, offset = 0x4, fixed_abs, tag = 'smem constant byte address 0x4 - core index']
  #allocation1 [shape = 'u32[144,128]{1,0:T(1,128)}', space=vmem, size = 0x12000, scoped, tag = 'internal scratch']
  #allocation2 [shape = 'f32[1,1]{1,0:T(1,128)S(1)}', space=vmem, size = 0x200, scoped, tag = 'scoped memory for tpu_custom_call.1']
  %s0 = inlined_call_operand.hbm [shape: f32[16,32], index: 0, kind: input, shape index: {}]
  %s1 = inlined_call_operand.hbm [shape: f32[32,32], index: 1, kind: input, shape index: {}]
  %s2 = inlined_call_operand.vmem [shape: f32[1,32], index: 2, kind: input, shape index: {}]
  %s3 = inlined_call_operand.vmem [shape: f32[1,32], index: 3, kind: input, shape index: {}]
  %s4 = inlined_call_operand.<no memory space> [shape: f32[1,1], index: 4, kind: input, shape index: {}]
  %s5 = inlined_call_operand.vmem [shape: f32[16,1], index: 5, kind: output, shape index: {}]
  %s6 = sld [smem:[#allocation0]]
  $region61: #{tpu_custom_call.1} parent=0
    _
  %s8 = ssub.s32 1, %s6
  %s9 = scalar_select 0, %s8, %s6
  %v10 = vstv %s4
  %11 = vst [vmem:[#allocation2] sm:$0x1] %v10
  $region1: #{tpu_custom_call.1} parent=0
    #allocation3 [shape = 'u8[8192]{0}', space=vmem, size = 0x2000, scoped, tag = 'input window, operand 0']
    #allocation4 [shape = 's32[2]{0}', space=sflag, size = 0x8, scoped, tag = 'scoped memory for tpu_custom_call.1']
    #allocation5 [shape = 'u8[16384]{0}', space=vmem, size = 0x4000, scoped, tag = 'input window, operand 1, single buffered']
    #allocation6 [shape = 's32[1]{0}', space=sflag, size = 0x4, scoped, tag = 'scoped memory for tpu_custom_call.1']
    %12 = vsyncpa [#allocation4], 0
    %s13 = scalar_lea.sflag [#allocation4], 1
    %14 = vsyncpa %s13, 0
    %15 = vsyncpa [#allocation6], 0
    loop: start=0, step=1, limit=4
    $region2: #{tpu_custom_call.1} parent=1 // loop_pre_header
      _
    $region3: #{tpu_custom_call.1} parent=1 // loop_header
      %s17 = sphi 0, %s21
      %p18 = scmp.ge.s32.totalorder %s17, 4
      %s24 = sphi 0, %s36
      %s25 = sphi 0, %s32
      %s26 = sphi 0, %s24
      %s27 = sphi 0, %s25
      %s28 = sphi 0, %s26
      %s29 = sphi 0, %s27
      %s41 = sphi 0, %s43
      %s44 = sphi 0, %s41
      %s45 = sphi 0, %s44
      %s61 = sphi 0, %s45
      %s65 = sphi 0, %s65
      %s67 = sphi 0, %s65
      %s68 = sphi 0, %s67
      %s82 = sphi 0, %s68
      %s86 = sphi 0, %s86
      %s88 = sphi 0, %s86
      %s89 = sphi 0, %s88
      %s103 = sphi 0, %s89
      %s107 = sphi 0, %s107
      %s109 = sphi 0, %s107
      %s110 = sphi 0, %s109
      %s124 = sphi 0, %s110
      %s128 = sphi 0, %s128
      %s130 = sphi 0, %s128
      %s131 = sphi 0, %s130
      %s145 = sphi 0, %s131
      %s151 = sphi 0, %s153
      %s154 = sphi 0, %s151
      %s155 = sphi 0, %s154
      %s171 = sphi 0, %s155
    $region4: #{tpu_custom_call.1} parent=1 // loop_header_branch
      %20 = sbr.rel (%p18) target = $region8
    $region5: #{tpu_custom_call.1} parent=1 // loop_body
      %s22 = ssub.s32 %s17, 1
      %s23 = ssub.s32 %s17, 2
      %s30 = sadd.s32 1, %s25
      %p31 = scmp.ge.s32.totalorder %s30, 1
      %s32 = scalar_select %p31, 0, %s30
      %s33 = sadd.s32 1, %s24
      %s34 = scalar_select %p31, %s33, %s24
      %p35 = scmp.ge.s32.totalorder %s34, 2
      %s36 = scalar_select %p35, 0, %s34
      %s37 = ssub.s32 %s24, %s36
      %s38 = ssub.s32 %s25, %s32
      %s39 = sor.u32 %s37, %s38
      %p40 = scmp.eq.s32.totalorder %s39, 0
      %s42 = sadd.s32 %s41, 1
      %s43 = scalar_select %p40, %s41, %s42
      %p46 = pneg %p40
      %p47 = scmp.eq.s32.totalorder %s17, 1
      %p48 = por %p46, %p47
      %p49 = scmp.ne.s32.totalorder %s41, %s44
      %p50 = scmp.eq.s32.totalorder %s17, 0
      %p51 = por %p49, %p50
      %p52 = scmp.ne.s32.totalorder %s41, %s44
      %p53 = scmp.eq.s32.totalorder %s22, 1
      %p54 = por %p52, %p53
      %p55 = scmp.ne.s32.totalorder %s44, %s45
      %p56 = scmp.eq.s32.totalorder %s22, 0
      %p57 = por %p55, %p56
      %p58 = scmp.ne.s32.totalorder %s44, %s45
      %p59 = scmp.eq.s32.totalorder %s23, 1
      %p60 = por %p58, %p59
      %p62 = scmp.ne.s32.totalorder %s45, %s61
      %p63 = scmp.eq.s32.totalorder %s23, 0
      %p64 = por %p62, %p63
      %s66 = sadd.s32 %s65, 1
      %p69 = scmp.eq.s32.totalorder %s17, 1
      %p70 = scmp.ne.s32.totalorder %s65, %s67
      %p71 = scmp.eq.s32.totalorder %s17, 0
      %p72 = por %p70, %p71
      %p73 = scmp.ne.s32.totalorder %s65, %s67
      %p74 = scmp.eq.s32.totalorder %s22, 1
      %p75 = por %p73, %p74
      %p76 = scmp.ne.s32.totalorder %s67, %s68
      %p77 = scmp.eq.s32.totalorder %s22, 0
      %p78 = por %p76, %p77
      %p79 = scmp.ne.s32.totalorder %s67, %s68
      %p80 = scmp.eq.s32.totalorder %s23, 1
      %p81 = por %p79, %p80
      %p83 = scmp.ne.s32.totalorder %s68, %s82
      %p84 = scmp.eq.s32.totalorder %s23, 0
      %p85 = por %p83, %p84
      %s87 = sadd.s32 %s86, 1
      %p90 = scmp.eq.s32.totalorder %s17, 1
      %p91 = scmp.ne.s32.totalorder %s86, %s88
      %p92 = scmp.eq.s32.totalorder %s17, 0
      %p93 = por %p91, %p92
      %p94 = scmp.ne.s32.totalorder %s86, %s88
      %p95 = scmp.eq.s32.totalorder %s22, 1
      %p96 = por %p94, %p95
      %p97 = scmp.ne.s32.totalorder %s88, %s89
      %p98 = scmp.eq.s32.totalorder %s22, 0
      %p99 = por %p97, %p98
      %p100 = scmp.ne.s32.totalorder %s88, %s89
      %p101 = scmp.eq.s32.totalorder %s23, 1
      %p102 = por %p100, %p101
      %p104 = scmp.ne.s32.totalorder %s89, %s103
      %p105 = scmp.eq.s32.totalorder %s23, 0
      %p106 = por %p104, %p105
      %s108 = sadd.s32 %s107, 1
      %p111 = scmp.eq.s32.totalorder %s17, 1
      %p112 = scmp.ne.s32.totalorder %s107, %s109
      %p113 = scmp.eq.s32.totalorder %s17, 0
      %p114 = por %p112, %p113
      %p115 = scmp.ne.s32.totalorder %s107, %s109
      %p116 = scmp.eq.s32.totalorder %s22, 1
      %p117 = por %p115, %p116
      %p118 = scmp.ne.s32.totalorder %s109, %s110
      %p119 = scmp.eq.s32.totalorder %s22, 0
      %p120 = por %p118, %p119
      %p121 = scmp.ne.s32.totalorder %s109, %s110
      %p122 = scmp.eq.s32.totalorder %s23, 1
      %p123 = por %p121, %p122
      %p125 = scmp.ne.s32.totalorder %s110, %s124
      %p126 = scmp.eq.s32.totalorder %s23, 0
      %p127 = por %p125, %p126
      %s129 = sadd.s32 %s128, 1
      %p132 = scmp.eq.s32.totalorder %s17, 1
      %p133 = scmp.ne.s32.totalorder %s128, %s130
      %p134 = scmp.eq.s32.totalorder %s17, 0
      %p135 = por %p133, %p134
      %p136 = scmp.ne.s32.totalorder %s128, %s130
      %p137 = scmp.eq.s32.totalorder %s22, 1
      %p138 = por %p136, %p137
      %p139 = scmp.ne.s32.totalorder %s130, %s131
      %p140 = scmp.eq.s32.totalorder %s22, 0
      %p141 = por %p139, %p140
      %p142 = scmp.ne.s32.totalorder %s130, %s131
      %p143 = scmp.eq.s32.totalorder %s23, 1
      %p144 = por %p142, %p143
      %p146 = scmp.ne.s32.totalorder %s131, %s145
      %p147 = scmp.eq.s32.totalorder %s23, 0
      %p148 = por %p146, %p147
      %s149 = ssub.s32 %s24, %s36
      %p150 = scmp.eq.s32.totalorder %s149, 0
      %s152 = sadd.s32 %s151, 1
      %s153 = scalar_select %p150, %s151, %s152
      %p156 = pneg %p150
      %p157 = scmp.eq.s32.totalorder %s17, 1
      %p158 = por %p156, %p157
      %p159 = scmp.ne.s32.totalorder %s151, %s154
      %p160 = scmp.eq.s32.totalorder %s17, 0
      %p161 = por %p159, %p160
      %p162 = scmp.ne.s32.totalorder %s151, %s154
      %p163 = scmp.eq.s32.totalorder %s22, 1
      %p164 = por %p162, %p163
      %p165 = scmp.ne.s32.totalorder %s154, %s155
      %p166 = scmp.eq.s32.totalorder %s22, 0
      %p167 = por %p165, %p166
      %p168 = scmp.ne.s32.totalorder %s154, %s155
      %p169 = scmp.eq.s32.totalorder %s23, 1
      %p170 = por %p168, %p169
      %p172 = scmp.ne.s32.totalorder %s155, %s171
      %p173 = scmp.eq.s32.totalorder %s23, 0
      %p174 = por %p172, %p173
      %p175 = scmp.le.s32.totalorder 1, %s17
      %p176 = scmp.lt.s32.totalorder %s17, 3
      %p177 = pnand %p175, %p176
      %p178 = pneg %p177
      // Predicated region
      $region9: #{tpu_custom_call.1} parent=5 // pred_check
        _
      $region10: #{tpu_custom_call.1} parent=5 // pred_check_branch
        %180 = sbr.rel (%p177) target = $region12
      $region11: #{tpu_custom_call.1} parent=5 // pred_region
        %s181 = ssub.s32 %s17, 1
        // Predicated region
        $region13: #{tpu_custom_call.1} parent=11 // pred_check
          %p182 = pneg %p78
        $region14: #{tpu_custom_call.1} parent=11 // pred_check_branch
          %184 = sbr.rel (%p182) target = $region16
        $region15: #{tpu_custom_call.1} parent=11 // pred_region
          %s186 = ssub.s32 512, 512
          %187 = vsyncadd [#allocation6], %s186
          %s188 = sshll.u32 [#allocation5], 4
          %s189 = int_to_ptr.vmem [resolvable:$true] %s188
          %194 = dma.hbm_to_vmem [thread:$0]  %s1, 512, %s189, [#allocation6], 128, 128, 8
        $region16: #{tpu_custom_call.1} parent=11 // pred_fallthru
          _
        // Predicated region
        $region17: #{tpu_custom_call.1} parent=11 // pred_check
          %p195 = pneg %p99
        $region18: #{tpu_custom_call.1} parent=11 // pred_check_branch
          %197 = sbr.rel (%p195) target = $region20
        $region19: #{tpu_custom_call.1} parent=11 // pred_region
          _
        $region20: #{tpu_custom_call.1} parent=11 // pred_fallthru
          _
        // Predicated region
        $region21: #{tpu_custom_call.1} parent=11 // pred_check
          %p198 = pneg %p120
        $region22: #{tpu_custom_call.1} parent=11 // pred_check_branch
          %200 = sbr.rel (%p198) target = $region24
        $region23: #{tpu_custom_call.1} parent=11 // pred_region
          _
        $region24: #{tpu_custom_call.1} parent=11 // pred_fallthru
          _
        // Predicated region
        $region25: #{tpu_custom_call.1} parent=11 // pred_check
          %p201 = pneg %p141
        $region26: #{tpu_custom_call.1} parent=11 // pred_check_branch
          %203 = sbr.rel (%p201) target = $region28
        $region27: #{tpu_custom_call.1} parent=11 // pred_region
          _
        $region28: #{tpu_custom_call.1} parent=11 // pred_fallthru
          _
      $region12: #{tpu_custom_call.1} parent=5 // pred_fallthru
        _
      %p204 = scmp.lt.s32.totalorder %s17, 2
      // Predicated region
      $region29: #{tpu_custom_call.1} parent=5 // pred_check
        %p205 = pneg %p204
      $region30: #{tpu_custom_call.1} parent=5 // pred_check_branch
        %207 = sbr.rel (%p205) target = $region32
      $region31: #{tpu_custom_call.1} parent=5 // pred_region
        // Predicated region
        $region33: #{tpu_custom_call.1} parent=31 // pred_check
          %p208 = pneg %p51
        $region34: #{tpu_custom_call.1} parent=31 // pred_check_branch
          %210 = sbr.rel (%p208) target = $region36
        $region35: #{tpu_custom_call.1} parent=31 // pred_region
          %s211 = sand.u32 %s41, 1
          %s212 = scalar_lea.sflag [#allocation4], %s211
          %s213 = sand.u32 %s41, 1
          %s214 = smul.addr %s213, 8
          %s215 = scalar_lea.vmem [#allocation3], %s214
          %s217 = ssub.s32 128, 128
          %218 = vsyncadd %s212, %s217
          %s219 = sadd.s32 %s25, %s24
          %s220 = smul.addr %s219, 128
          %s221 = scalar_lea.hbm %s0, %s220
          %s223 = sshll.u32 %s215, 4
          %s224 = int_to_ptr.vmem [resolvable:$true] %s223
          %226 = dma.hbm_to_vmem [thread:$0]  %s221, 128, %s224, %s212
        $region36: #{tpu_custom_call.1} parent=31 // pred_fallthru
          _
      $region32: #{tpu_custom_call.1} parent=5 // pred_fallthru
        _
      %p227 = scmp.le.s32.totalorder 1, %s17
      %p228 = scmp.lt.s32.totalorder %s17, 3
      %p229 = pnand %p227, %p228
      %p230 = pneg %p229
      // Predicated region
      $region37: #{tpu_custom_call.1} parent=5 // pred_check
        _
      $region38: #{tpu_custom_call.1} parent=5 // pred_check_branch
        %232 = sbr.rel (%p229) target = $region40
      $region39: #{tpu_custom_call.1} parent=5 // pred_region
        %s233 = ssub.s32 %s17, 1
        %s234 = sand.u32 %s44, 1
        %s235 = scalar_lea.sflag [#allocation4], %s234
        %s236 = sand.u32 %s44, 1
        %s237 = smul.addr %s236, 8
        %s238 = scalar_lea.vmem [#allocation3], %s237
        // Predicated region
        $region41: #{tpu_custom_call.1} parent=39 // pred_check
          %p239 = pneg %p57
        $region42: #{tpu_custom_call.1} parent=39 // pred_check_branch
          %241 = sbr.rel (%p239) target = $region44
        $region43: #{tpu_custom_call.1} parent=39 // pred_region
          %242 = dma.done %s235, 128
        $region44: #{tpu_custom_call.1} parent=39 // pred_fallthru
          _
        // Predicated region
        $region45: #{tpu_custom_call.1} parent=39 // pred_check
          %p243 = pneg %p78
        $region46: #{tpu_custom_call.1} parent=39 // pred_check_branch
          %245 = sbr.rel (%p243) target = $region48
        $region47: #{tpu_custom_call.1} parent=39 // pred_region
          %246 = dma.done [#allocation6], 512
        $region48: #{tpu_custom_call.1} parent=39 // pred_fallthru
          _
        %s247 = sand.u32 %s44, 1
        %s248 = scalar_lea.sflag [#allocation4], %s247
        %s249 = sand.u32 %s44, 1
        %s250 = smul.addr %s249, 8
        %s251 = scalar_lea.vmem [#allocation3], %s250
        %p252 = pneg %p57
        %p253 = pneg %p54
        %p254 = pneg %p78
        %p255 = pneg %p75
        %p256 = pneg %p99
        %p257 = pneg %p96
        %p258 = pneg %p120
        %p259 = pneg %p117
        %p260 = pneg %p141
        %p261 = pneg %p138
        %p262 = pneg %p167
        %p263 = pneg %p164
        %p264 = scmp.lt.s32.totalorder %s26, 1
        %s265 = scalar_select %p264, %s26, 1
        %s266 = smul.addr %s265, 8
        %s267 = scalar_lea.vmem %s5, %s266
        %p268 = scmp.lt.s32.totalorder %s26, 1
        %s269 = scalar_select %p268, %s26, 1
        %s270 = smul.addr %s269, 8
        %s271 = scalar_lea.vmem %s5, %s270
        %v272 = vld [vmem:[%s238] sm:$0xff]
        %v273 = vld [vmem:[#allocation5] sm:$0xff]
        %v274 = vld [vmem:[#allocation5 + $0x8] sm:$0xff]
        %v275 = vld [vmem:[#allocation5 + $0x10] sm:$0xff]
        %v276 = vld [vmem:[#allocation5 + $0x18] sm:$0xff]
        %v277 = vld [vmem:[%s2] sm:$0x1]
        %v279 = vlaneseq
        %v280 = vshrl.u32 %v279, 7
        %v281 = vsub.s32 0, %v280
        %v282 = vrot.slane %v277, %v281
        %vm284 = vcmask 261120
        %v286 = vsel %vm284, %v272, 0
        %288 = vmatprep.subr.mxu0 0.0
        %289 = vmatpush1.msra.mxu0 0.0
        %290 = vmatprep.subr.mxu0 0.0
        %291 = vmatpush1.msra.mxu0 0.0
        %292 = vmatprep.subr.mxu0 0.0
        %293 = vmatpush1.msra.mxu0 0.0
        %294 = vmatprep.subr.mxu0 0.0
        %295 = vmatpush1.msra.mxu0 0.0
        %296 = vmatprep.subr.mxu0 0.0
        %297 = vmatpush1.msra.mxu0 0.0
        %298 = vmatprep.subr.mxu0 0.0
        %299 = vmatpush1.msra.mxu0 0.0
        %300 = vmatprep.subr.mxu0 0.0
        %301 = vmatpush1.msra.mxu0 0.0
        %302 = vmatprep.subr.mxu0 0.0
        %303 = vmatpush1.msra.mxu0 0.0
        %304 = vmatprep.subr.mxu0 0.0
        %305 = vmatpush1.msra.mxu0 0.0
        %306 = vmatprep.subr.mxu0 0.0
        %307 = vmatpush1.msra.mxu0 0.0
        %308 = vmatprep.subr.mxu0 0.0
        %309 = vmatpush1.msra.mxu0 0.0
        %310 = vmatprep.subr.mxu0 0.0
        %311 = vmatpush1.msra.mxu0 0.0
        %312 = vmatprep.subr.mxu0 0.0
        %313 = vmatpush1.msra.mxu0 %v276
        %314 = vmatprep.subr.mxu0 0.0
        %315 = vmatpush1.msra.mxu0 %v275
        %316 = vmatprep.subr.mxu0 0.0
        %317 = vmatpush1.msra.mxu0 %v274
        %318 = vmatprep.subr.mxu0 0.0
        %319 = vmatpush1.msra.mxu0 %v273
        %320 = vmatprep.subr.mxu0 0.0
        %321 = vmatpush2.msra.mxu0 0.0
        %322 = vmatprep.subr.mxu0 0.0
        %323 = vmatpush2.msra.mxu0 0.0
        %324 = vmatprep.subr.mxu0 0.0
        %325 = vmatpush2.msra.mxu0 0.0
        %326 = vmatprep.subr.mxu0 0.0
        %327 = vmatpush2.msra.mxu0 0.0
        %328 = vmatprep.subr.mxu0 0.0
        %329 = vmatpush2.msra.mxu0 0.0
        %330 = vmatprep.subr.mxu0 0.0
        %331 = vmatpush2.msra.mxu0 0.0
        %332 = vmatprep.subr.mxu0 0.0
        %333 = vmatpush2.msra.mxu0 0.0
        %334 = vmatprep.subr.mxu0 0.0
        %335 = vmatpush2.msra.mxu0 0.0
        %336 = vmatprep.subr.mxu0 0.0
        %337 = vmatpush2.msra.mxu0 0.0
        %338 = vmatprep.subr.mxu0 0.0
        %339 = vmatpush2.msra.mxu0 0.0
        %340 = vmatprep.subr.mxu0 0.0
        %341 = vmatpush2.msra.mxu0 0.0
        %342 = vmatprep.subr.mxu0 0.0
        %343 = vmatpush2.msra.mxu0 0.0
        %344 = vmatprep.subr.mxu0 0.0
        %345 = vmatpush2.msra.mxu0 0.0
        %346 = vmatprep.subr.mxu0 0.0
        %347 = vmatpush2.msra.mxu0 0.0
        %348 = vmatprep.subr.mxu0 0.0
        %349 = vmatpush2.msra.mxu0 0.0
        %350 = vmatprep.subr.mxu0 0.0
        %351 = vmatpush2.msra.mxu0 0.0
        %352 = vmatprep.mubr.f32.mxu0 0.0
        %353 = vmatmul.mubr.f32.gmra.mxu0 %v286
        %v354 = vpop.f32.mrf.mxu0
        %v355 = vadd.f32 %v282, %v354
        %v356 = vpop.f32.mrf.mxu0
        %357 = vdwg.mxu0
        %v358 = vmax.f32 %v355, 0.0
        %v359 = vsel %vm284, %v358, 0.0
        %360 = vadd.xlane.f32.xlu0 %v359
        %v361 = vpop.xlane.xlu0 %360
        %v362 = vmul.f32 %v361, 0.03125
        %v363 = vsub.f32 %v358, %v362
        %v364 = vmul.f32 %v363, %v363
        %v365 = vsel %vm284, %v364, 0.0
        %366 = vadd.xlane.f32.xlu0 %v365
        %v367 = vpop.xlane.xlu0 %366
        %v368 = vmul.f32 %v367, 0.03125
        %v369 = vld [vmem:[%s3] sm:$0x1]
        %v371 = vlaneseq
        %v372 = vshrl.u32 %v371, 7
        %v373 = vsub.s32 0, %v372
        %v374 = vrot.slane %v369, %v373
        %v376 = vmul.f32 %v363, %v374
        %v377 = vsel %vm284, %v376, 0.0
        %378 = vadd.xlane.f32.xlu0 %v377
        %v379 = vpop.xlane.xlu0 %378
        %v380 = vadd.f32 %v368, 1e-12
        %v381 = vrsqrt.pop %v380
        %v382 = vmul.f32 %v379, %v381
        %v383 = vld [vmem:[#allocation2] sm:$0x1]
        %v385 = vlaneseq
        %v386 = vshrl.u32 %v385, 7
        %v387 = vsub.s32 0, %v386
        %v388 = vrot.slane %v383, %v387
        %v390 = vadd.f32 %v382, %v388
        %vm391 = vcmask 7168
        %392 = vst.msk [vmem:[%s271] sm:$0xff] %vm391, %v390
        %p393 = scmp.lt.s32.totalorder %s26, 1
        %s394 = scalar_select %p393, %s26, 1
        %s395 = smul.addr %s394, 8
        %s396 = scalar_lea.vmem %s5, %s395
        // Predicated region
        $region49: #{tpu_custom_call.1} parent=39 // pred_check
          %p397 = pneg %p164
        $region50: #{tpu_custom_call.1} parent=39 // pred_check_branch
          %399 = sbr.rel (%p397) target = $region52
        $region51: #{tpu_custom_call.1} parent=39 // pred_region
          _
        $region52: #{tpu_custom_call.1} parent=39 // pred_fallthru
          _
      $region40: #{tpu_custom_call.1} parent=5 // pred_fallthru
        _
      %p400 = scmp.le.s32.totalorder 2, %s17
      // Predicated region
      $region53: #{tpu_custom_call.1} parent=5 // pred_check
        %p401 = pneg %p400
      $region54: #{tpu_custom_call.1} parent=5 // pred_check_branch
        %403 = sbr.rel (%p401) target = $region56
      $region55: #{tpu_custom_call.1} parent=5 // pred_region
        %s404 = ssub.s32 %s17, 2
        // Predicated region
        $region57: #{tpu_custom_call.1} parent=55 // pred_check
          %p405 = pneg %p170
        $region58: #{tpu_custom_call.1} parent=55 // pred_check_branch
          %407 = sbr.rel (%p405) target = $region60
        $region59: #{tpu_custom_call.1} parent=55 // pred_region
          %p408 = scmp.lt.s32.totalorder %s28, 1
          %s409 = scalar_select %p408, %s28, 1
          %s410 = smul.addr %s409, 8
          %s411 = scalar_lea.vmem %s5, %s410
        $region60: #{tpu_custom_call.1} parent=55 // pred_fallthru
          _
      $region56: #{tpu_custom_call.1} parent=5 // pred_fallthru
        _
    $region6: #{tpu_custom_call.1} parent=1 // loop_footer
      %s21 = sadd.s32 1, %s17
    $region7: #{tpu_custom_call.1} parent=1 // loop_footer_branch
      %16 = sbr.rel target = $region3
    $region8: #{tpu_custom_call.1} parent=1 // loop_exit
      _
    %412 = vsyncpa [#allocation4], 1
    %s413 = scalar_lea.sflag [#allocation4], 1
    %414 = vsyncpa %s413, 1
    %415 = vsyncpa [#allocation6], 1

</llo_original>
